<compile_context>
chip_gen: v7x
topology: tpu7x:2x2x1
jax: 0.10.0
libtpu: 0.0.40
codegen_flags: <defaults>
</compile_context>

<pallas_src>
import jax
import jax.numpy as jnp
from jax.experimental import pallas as pl
from jax.experimental.pallas import tpu as pltpu


# ----------------------------------------------------------------------------
# Helpers mirroring the PyTorch module configuration.
# ----------------------------------------------------------------------------
def make_divisible(v, divisor, min_value=None):
    # Standard MobileNet helper used by the PyTorch code.
    if min_value is None:
        min_value = divisor
    new_v = max(min_value, int(v + divisor / 2) // divisor * divisor)
    if new_v < 0.9 * v:
        new_v += divisor
    return new_v


def _ceil_div(a, b):
    return -(-a // b)


_MIB = 1024 * 1024


def _vmem_budgets():
    """(tile_budget_bytes, vmem_limit_bytes, need_two_grid_steps)."""
    cap = None
    try:
        cap = getattr(pltpu.get_tpu_info(), "vmem_capacity_bytes", None)
    except Exception:
        cap = None
    if cap is not None and cap <= 96 * _MIB:
        # v7x-class: 64 MiB VMEM per TensorCore, 2 TCs per chip.  Keep 16+ MiB
        # headroom for Mosaic internal scratch, and keep >=2 grid steps so the
        # "parallel" axis can feed both TensorCores.
        return 24 * _MIB, 44 * _MIB, True
    if cap is not None:
        # v5e / v6e: 128 MiB physical VMEM, single TensorCore -> biggest tile
        # wins; no point splitting the grid for core parallelism.
        return 48 * _MIB, 64 * _MIB, False
    # Unknown backend: conservative defaults valid on every generation.
    return 16 * _MIB, 32 * _MIB, True


def _pick_images_per_block(n, c, hw, itemsize, tile_budget, two_steps):
    """Largest divisor of N fitting the VMEM tile budget (no padding needed)."""
    per_image_bytes = c * hw * itemsize
    # input + output tiles, each double-buffered by the pipeliner.
    denom = 4 * per_image_bytes
    nb_max = max(1, tile_budget // denom)
    nb_max = min(n, nb_max)
    if two_steps and n >= 2:
        # Keep at least 2 grid steps so both v7x TensorCores get work.
        nb_max = min(nb_max, _ceil_div(n, 2))
    # Largest divisor of n not exceeding nb_max -> grid covers N exactly,
    # no jnp.pad / out[:N] extra HBM passes, no partial-block OOB reads.
    for nb in range(int(nb_max), 0, -1):
        if n % nb == 0:
            return nb
    return 1


# ----------------------------------------------------------------------------
# Pallas kernel: one block of Nb images, full (C, HW) slab per image in VMEM.
# ----------------------------------------------------------------------------
def se_kernel(x_ref, w1_ref, b1_ref, w2_ref, b2_ref, o_ref):
    # x_ref/o_ref: (Nb, C, HW)
    # w1_ref: (C, Csq)   b1_ref: (1, Csq)   w2_ref: (Csq, C)   b2_ref: (1, C)
    hw = x_ref.shape[2]
    inv_hw = jnp.float32(1.0 / hw)

    # --- Squeeze: global average pool over the spatial (lane) axis. ---------
    # Accumulate directly in f32: no full-tile f32 temporary is materialized,
    # only the (Nb, C) pooled vector stays live.
    pooled = jnp.sum(x_ref[...], axis=2, dtype=jnp.float32) * inv_hw  # (Nb, C)

    # --- Excite: 1x1 conv -> Swish -> 1x1 conv -> Sigmoid on (Nb, *). -------
    h = jnp.dot(pooled, w1_ref[...], preferred_element_type=jnp.float32)
    h = h + b1_ref[...]
    h = h * jax.nn.sigmoid(h)                                   # Swish (Nb, Csq)

    s = jnp.dot(h, w2_ref[...], preferred_element_type=jnp.float32)
    s = jax.nn.sigmoid(s + b2_ref[...])                         # gate  (Nb, C)

    # --- Rescale: channel-wise multiply, streamed from the input ref. -------
    gate = s[:, :, None].astype(x_ref.dtype)                    # (Nb, C, 1)
    o_ref[...] = (x_ref[...] * gate).astype(o_ref.dtype)


# ----------------------------------------------------------------------------
# Wrapper.
# ----------------------------------------------------------------------------
@jax.jit
def squeeze_and_excite(x, w1, b1, w2, b2):
    """x: (N, C, H, W).  w1: (C, Csq), b1: (1, Csq), w2: (Csq, C), b2: (1, C)."""
    N, C, H, W = x.shape
    Csq = w1.shape[1]
    HW = H * W
    itemsize = jnp.dtype(x.dtype).itemsize

    tile_budget, vmem_limit, two_steps = _vmem_budgets()
    nb = _pick_images_per_block(N, C, HW, itemsize, tile_budget, two_steps)
    n_blocks = N // nb  # exact: nb divides N by construction

    x2 = x.reshape(N, C, HW)  # contiguous reshape: no HBM copy

    w_itemsize = jnp.dtype(w1.dtype).itemsize
    weight_bytes = (C * Csq + Csq + Csq * C + C) * w_itemsize
    cost = pl.CostEstimate(
        flops=3 * N * C * HW + 4 * N * C * Csq,
        transcendentals=N * (C + 2 * Csq),
        bytes_accessed=2 * N * C * HW * itemsize + n_blocks * weight_bytes,
    )

    out = pl.pallas_call(
        se_kernel,
        out_shape=jax.ShapeDtypeStruct((N, C, HW), x.dtype),
        grid=(n_blocks,),
        in_specs=[
            pl.BlockSpec((nb, C, HW), lambda n: (n, 0, 0)),
            pl.BlockSpec((C, Csq), lambda n: (0, 0)),
            pl.BlockSpec((1, Csq), lambda n: (0, 0)),
            pl.BlockSpec((Csq, C), lambda n: (0, 0)),
            pl.BlockSpec((1, C), lambda n: (0, 0)),
        ],
        out_specs=pl.BlockSpec((nb, C, HW), lambda n: (n, 0, 0)),
        compiler_params=pltpu.CompilerParams(
            dimension_semantics=("parallel",),
            vmem_limit_bytes=vmem_limit,
        ),
        cost_estimate=cost,
    )(x2, w1, b1, w2, b2)

    return out.reshape(N, C, H, W)


# ----------------------------------------------------------------------------
# Pure-JAX reference mirroring the PyTorch forward.
# ----------------------------------------------------------------------------
def reference(x, w1, b1, w2, b2):
    y = jnp.mean(x.astype(jnp.float32), axis=(2, 3))        # (N, C)
    h = y @ w1 + b1                                          # (N, Csq)
    h = h * jax.nn.sigmoid(h)                                # Swish
    s = jax.nn.sigmoid(h @ w2 + b2)                          # (N, C)
    return (x * s[:, :, None, None].astype(x.dtype)).astype(x.dtype)


if __name__ == "__main__":
    # Module config: SqueezeAndExcite(channels=32, squeeze_channels=32)
    channels = 32
    squeeze_channels_arg = 32
    squeeze_factor = 4
    Csq = make_divisible(squeeze_channels_arg // squeeze_factor, 8)  # -> 8

    N, H, W = 2, 16, 16

    key = jax.random.PRNGKey(0)
    kx, k1, k2, k3, k4 = jax.random.split(key, 5)

    x = jax.random.normal(kx, (N, channels, H, W), dtype=jnp.float32)

    # Conv2d 1x1 weights folded to matmul form:
    #   se_reduce weight (Csq, C, 1, 1) -> w1 = (C, Csq)
    #   se_expand weight (C, Csq, 1, 1) -> w2 = (Csq, C)
    w1 = jax.random.normal(k1, (channels, Csq), dtype=jnp.float32) * 0.1
    b1 = jax.random.normal(k2, (1, Csq), dtype=jnp.float32) * 0.1
    w2 = jax.random.normal(k3, (Csq, channels), dtype=jnp.float32) * 0.1
    b2 = jax.random.normal(k4, (1, channels), dtype=jnp.float32) * 0.1

    out = squeeze_and_excite(x, w1, b1, w2, b2)
    out = jax.block_until_ready(out)

    ref = reference(x, w1, b1, w2, b2)
    assert out.shape == (N, channels, H, W)
    assert jnp.allclose(out, ref, atol=1e-5, rtol=1e-5), "mismatch vs reference"

    print("KERNEL_OK")
</pallas_src>

<mosaic_0001>
module attributes {stable_mosaic.version = 11 : i64} {
  func.func @se_kernel(%arg0: i32, %arg1: memref<1x32x256xf32, #tpu.memory_space<vmem>>, %arg2: memref<32x8xf32, #tpu.memory_space<vmem>>, %arg3: memref<1x8xf32, #tpu.memory_space<vmem>>, %arg4: memref<8x32xf32, #tpu.memory_space<vmem>>, %arg5: memref<1x32xf32, #tpu.memory_space<vmem>>, %arg6: memref<1x32x256xf32, #tpu.memory_space<vmem>>) attributes {dimension_semantics = [#tpu.dimension_semantics<parallel>], iteration_bounds = array<i64: 2>, scalar_prefetch = 0 : i64, scratch_operands = 0 : i64, tpu.core_type = #tpu.core_type<tc>, window_params = [{transform_indices = @transform_0, window_bounds = array<i64: 1, 32, 256>}, {pipeline_mode = #tpu.pipeline_mode<synchronous>, transform_indices = @transform_1, window_bounds = array<i64: 32, 8>}, {pipeline_mode = #tpu.pipeline_mode<synchronous>, transform_indices = @transform_2, window_bounds = array<i64: 1, 8>}, {pipeline_mode = #tpu.pipeline_mode<synchronous>, transform_indices = @transform_3, window_bounds = array<i64: 8, 32>}, {pipeline_mode = #tpu.pipeline_mode<synchronous>, transform_indices = @transform_4, window_bounds = array<i64: 1, 32>}, {transform_indices = @transform_5, window_bounds = array<i64: 1, 32, 256>}]} {
    %c0 = arith.constant 0 : index
    %c0_0 = arith.constant 0 : index
    %c0_1 = arith.constant 0 : index
    %0 = vector.load %arg1[%c0, %c0_0, %c0_1] : memref<1x32x256xf32, #tpu.memory_space<vmem>>, vector<1x32x256xf32>
    %cst = arith.constant dense<0.000000e+00> : vector<1x32xf32>
    %1 = vector.multi_reduction <add>, %0, %cst [2] : vector<1x32x256xf32> to vector<1x32xf32>
    %cst_2 = arith.constant 3.906250e-03 : f32
    %2 = vector.broadcast %cst_2 : f32 to vector<1x32xf32>
    %3 = arith.mulf %1, %2 : vector<1x32xf32>
    %c0_3 = arith.constant 0 : index
    %c0_4 = arith.constant 0 : index
    %4 = vector.load %arg2[%c0_3, %c0_4] : memref<32x8xf32, #tpu.memory_space<vmem>>, vector<32x8xf32>
    %cst_5 = arith.constant dense<0.000000e+00> : vector<1x8xf32>
    %5 = tpu.matmul %3, %4, %cst_5 {dimension_numbers = #tpu.dot_dimension_numbers<[1], [0], [0], [1], [0, 0, 1, 1], [], []>} : vector<1x32xf32>, vector<32x8xf32>, vector<1x8xf32> -> vector<1x8xf32>
    %c0_6 = arith.constant 0 : index
    %c0_7 = arith.constant 0 : index
    %6 = vector.load %arg3[%c0_6, %c0_7] : memref<1x8xf32, #tpu.memory_space<vmem>>, vector<1x8xf32>
    %7 = arith.addf %5, %6 : vector<1x8xf32>
    %8 = arith.negf %7 : vector<1x8xf32>
    %9 = math.exp %8 : vector<1x8xf32>
    %cst_8 = arith.constant 1.000000e+00 : f32
    %10 = vector.broadcast %cst_8 : f32 to vector<1x8xf32>
    %11 = arith.addf %10, %9 : vector<1x8xf32>
    %12 = arith.divf %10, %11 : vector<1x8xf32>
    %13 = arith.mulf %7, %12 : vector<1x8xf32>
    %c0_9 = arith.constant 0 : index
    %c0_10 = arith.constant 0 : index
    %14 = vector.load %arg4[%c0_9, %c0_10] : memref<8x32xf32, #tpu.memory_space<vmem>>, vector<8x32xf32>
    %cst_11 = arith.constant dense<0.000000e+00> : vector<1x32xf32>
    %15 = tpu.matmul %13, %14, %cst_11 {dimension_numbers = #tpu.dot_dimension_numbers<[1], [0], [0], [1], [0, 0, 1, 1], [], []>} : vector<1x8xf32>, vector<8x32xf32>, vector<1x32xf32> -> vector<1x32xf32>
    %c0_12 = arith.constant 0 : index
    %c0_13 = arith.constant 0 : index
    %16 = vector.load %arg5[%c0_12, %c0_13] : memref<1x32xf32, #tpu.memory_space<vmem>>, vector<1x32xf32>
    %17 = arith.addf %15, %16 : vector<1x32xf32>
    %18 = arith.negf %17 : vector<1x32xf32>
    %19 = math.exp %18 : vector<1x32xf32>
    %cst_14 = arith.constant 1.000000e+00 : f32
    %20 = vector.broadcast %cst_14 : f32 to vector<1x32xf32>
    %21 = arith.addf %20, %19 : vector<1x32xf32>
    %22 = arith.divf %20, %21 : vector<1x32xf32>
    %23 = vector.shape_cast %22 : vector<1x32xf32> to vector<1x32x1xf32>
    %c0_15 = arith.constant 0 : index
    %c0_16 = arith.constant 0 : index
    %c0_17 = arith.constant 0 : index
    %24 = vector.load %arg1[%c0_15, %c0_16, %c0_17] : memref<1x32x256xf32, #tpu.memory_space<vmem>>, vector<1x32x256xf32>
    %25 = vector.broadcast %23 : vector<1x32x1xf32> to vector<1x32x256xf32>
    %26 = arith.mulf %24, %25 : vector<1x32x256xf32>
    %c0_18 = arith.constant 0 : index
    %c0_19 = arith.constant 0 : index
    %c0_20 = arith.constant 0 : index
    %27 = vector.load %arg6[%c0_18, %c0_19, %c0_20] : memref<1x32x256xf32, #tpu.memory_space<vmem>>, vector<1x32x256xf32>
    tpu.vector_store %arg6[%c0_18, %c0_19, %c0_20], %26 {strides = array<i32>} : memref<1x32x256xf32, #tpu.memory_space<vmem>>, vector<1x32x256xf32>,
    return
  }
  func.func @transform_0(%arg0: i32) -> (i32, i32, i32) {
    %c0_i32 = arith.constant 0 : i32
    %c0_i32_0 = arith.constant 0 : i32
    %c0_i32_1 = arith.constant 0 : i32
    return %arg0, %c0_i32, %c0_i32_0 : i32, i32, i32
  }
  func.func @transform_1(%arg0: i32) -> (i32, i32) {
    %c0_i32 = arith.constant 0 : i32
    %c0_i32_0 = arith.constant 0 : i32
    %c0_i32_1 = arith.constant 0 : i32
    return %c0_i32, %c0_i32_0 : i32, i32
  }
  func.func @transform_2(%arg0: i32) -> (i32, i32) {
    %c0_i32 = arith.constant 0 : i32
    %c0_i32_0 = arith.constant 0 : i32
    %c0_i32_1 = arith.constant 0 : i32
    return %c0_i32, %c0_i32_0 : i32, i32
  }
  func.func @transform_3(%arg0: i32) -> (i32, i32) {
    %c0_i32 = arith.constant 0 : i32
    %c0_i32_0 = arith.constant 0 : i32
    %c0_i32_1 = arith.constant 0 : i32
    return %c0_i32, %c0_i32_0 : i32, i32
  }
  func.func @transform_4(%arg0: i32) -> (i32, i32) {
    %c0_i32 = arith.constant 0 : i32
    %c0_i32_0 = arith.constant 0 : i32
    %c0_i32_1 = arith.constant 0 : i32
    return %c0_i32, %c0_i32_0 : i32, i32
  }
  func.func @transform_5(%arg0: i32) -> (i32, i32, i32) {
    %c0_i32 = arith.constant 0 : i32
    %c0_i32_0 = arith.constant 0 : i32
    %c0_i32_1 = arith.constant 0 : i32
    return %arg0, %c0_i32, %c0_i32_0 : i32, i32, i32
  }
}

</mosaic_0001>

<llo_original>
// kernel: squeeze_and_excite.1
$region0: #{squeeze_and_excite.1}
  #allocation0 [shape = 'u32[]', space=smem, size = 0x4, offset = 0x4, fixed_abs, tag = 'smem constant byte address 0x4 - core index']
  #allocation1 [shape = 'u32[144,128]{1,0:T(1,128)}', space=vmem, size = 0x12000, scoped, tag = 'internal scratch']
  %s0 = inlined_call_operand.vmem [shape: f32[2,32,256], index: 0, kind: input, shape index: {}]
  %s1 = inlined_call_operand.vmem [shape: f32[32,8], index: 1, kind: input, shape index: {}]
  %s2 = inlined_call_operand.vmem [shape: f32[1,8], index: 2, kind: input, shape index: {}]
  %s3 = inlined_call_operand.vmem [shape: f32[8,32], index: 3, kind: input, shape index: {}]
  %s4 = inlined_call_operand.vmem [shape: f32[1,32], index: 4, kind: input, shape index: {}]
  %s5 = inlined_call_operand.vmem [shape: f32[2,32,256], index: 5, kind: output, shape index: {}]
  %s6 = sld [smem:[#allocation0]]
  $region53: #{squeeze_and_excite.1} parent=0
    _
  %s8 = ssub.s32 1, %s6
  %s9 = scalar_select 0, %s8, %s6
  loop: start=0, step=1, limit=4
  $region2: #{squeeze_and_excite.1} parent=0 // loop_pre_header
    _
  $region3: #{squeeze_and_excite.1} parent=0 // loop_header
    %s11 = sphi 0, %s15
    %p12 = scmp.ge.s32.totalorder %s11, 4
    %s21 = sphi 0, %s23
    %s24 = sphi 0, %s21
    %s25 = sphi 0, %s24
    %s41 = sphi 0, %s25
    %s45 = sphi 0, %s45
    %s47 = sphi 0, %s45
    %s48 = sphi 0, %s47
    %s62 = sphi 0, %s48
    %s66 = sphi 0, %s66
    %s68 = sphi 0, %s66
    %s69 = sphi 0, %s68
    %s83 = sphi 0, %s69
    %s87 = sphi 0, %s87
    %s89 = sphi 0, %s87
    %s90 = sphi 0, %s89
    %s104 = sphi 0, %s90
    %s108 = sphi 0, %s108
    %s110 = sphi 0, %s108
    %s111 = sphi 0, %s110
    %s125 = sphi 0, %s111
    %s131 = sphi 0, %s133
    %s134 = sphi 0, %s131
    %s135 = sphi 0, %s134
    %s151 = sphi 0, %s135
  $region4: #{squeeze_and_excite.1} parent=0 // loop_header_branch
    %14 = sbr.rel (%p12) target = $region8
  $region5: #{squeeze_and_excite.1} parent=0 // loop_body
    %s16 = ssub.s32 %s11, 1
    %s17 = ssub.s32 %s11, 2
    %s18 = sadd.s32 %s11, 1
    %s19 = ssub.s32 %s11, %s18
    %p20 = scmp.eq.s32.totalorder %s19, 0
    %s22 = sadd.s32 %s21, 1
    %s23 = scalar_select %p20, %s21, %s22
    %p26 = pneg %p20
    %p27 = scmp.eq.s32.totalorder %s11, 1
    %p28 = por %p26, %p27
    %p29 = scmp.ne.s32.totalorder %s21, %s24
    %p30 = scmp.eq.s32.totalorder %s11, 0
    %p31 = por %p29, %p30
    %p32 = scmp.ne.s32.totalorder %s21, %s24
    %p33 = scmp.eq.s32.totalorder %s16, 1
    %p34 = por %p32, %p33
    %p35 = scmp.ne.s32.totalorder %s24, %s25
    %p36 = scmp.eq.s32.totalorder %s16, 0
    %p37 = por %p35, %p36
    %p38 = scmp.ne.s32.totalorder %s24, %s25
    %p39 = scmp.eq.s32.totalorder %s17, 1
    %p40 = por %p38, %p39
    %p42 = scmp.ne.s32.totalorder %s25, %s41
    %p43 = scmp.eq.s32.totalorder %s17, 0
    %p44 = por %p42, %p43
    %s46 = sadd.s32 %s45, 1
    %p49 = scmp.eq.s32.totalorder %s11, 1
    %p50 = scmp.ne.s32.totalorder %s45, %s47
    %p51 = scmp.eq.s32.totalorder %s11, 0
    %p52 = por %p50, %p51
    %p53 = scmp.ne.s32.totalorder %s45, %s47
    %p54 = scmp.eq.s32.totalorder %s16, 1
    %p55 = por %p53, %p54
    %p56 = scmp.ne.s32.totalorder %s47, %s48
    %p57 = scmp.eq.s32.totalorder %s16, 0
    %p58 = por %p56, %p57
    %p59 = scmp.ne.s32.totalorder %s47, %s48
    %p60 = scmp.eq.s32.totalorder %s17, 1
    %p61 = por %p59, %p60
    %p63 = scmp.ne.s32.totalorder %s48, %s62
    %p64 = scmp.eq.s32.totalorder %s17, 0
    %p65 = por %p63, %p64
    %s67 = sadd.s32 %s66, 1
    %p70 = scmp.eq.s32.totalorder %s11, 1
    %p71 = scmp.ne.s32.totalorder %s66, %s68
    %p72 = scmp.eq.s32.totalorder %s11, 0
    %p73 = por %p71, %p72
    %p74 = scmp.ne.s32.totalorder %s66, %s68
    %p75 = scmp.eq.s32.totalorder %s16, 1
    %p76 = por %p74, %p75
    %p77 = scmp.ne.s32.totalorder %s68, %s69
    %p78 = scmp.eq.s32.totalorder %s16, 0
    %p79 = por %p77, %p78
    %p80 = scmp.ne.s32.totalorder %s68, %s69
    %p81 = scmp.eq.s32.totalorder %s17, 1
    %p82 = por %p80, %p81
    %p84 = scmp.ne.s32.totalorder %s69, %s83
    %p85 = scmp.eq.s32.totalorder %s17, 0
    %p86 = por %p84, %p85
    %s88 = sadd.s32 %s87, 1
    %p91 = scmp.eq.s32.totalorder %s11, 1
    %p92 = scmp.ne.s32.totalorder %s87, %s89
    %p93 = scmp.eq.s32.totalorder %s11, 0
    %p94 = por %p92, %p93
    %p95 = scmp.ne.s32.totalorder %s87, %s89
    %p96 = scmp.eq.s32.totalorder %s16, 1
    %p97 = por %p95, %p96
    %p98 = scmp.ne.s32.totalorder %s89, %s90
    %p99 = scmp.eq.s32.totalorder %s16, 0
    %p100 = por %p98, %p99
    %p101 = scmp.ne.s32.totalorder %s89, %s90
    %p102 = scmp.eq.s32.totalorder %s17, 1
    %p103 = por %p101, %p102
    %p105 = scmp.ne.s32.totalorder %s90, %s104
    %p106 = scmp.eq.s32.totalorder %s17, 0
    %p107 = por %p105, %p106
    %s109 = sadd.s32 %s108, 1
    %p112 = scmp.eq.s32.totalorder %s11, 1
    %p113 = scmp.ne.s32.totalorder %s108, %s110
    %p114 = scmp.eq.s32.totalorder %s11, 0
    %p115 = por %p113, %p114
    %p116 = scmp.ne.s32.totalorder %s108, %s110
    %p117 = scmp.eq.s32.totalorder %s16, 1
    %p118 = por %p116, %p117
    %p119 = scmp.ne.s32.totalorder %s110, %s111
    %p120 = scmp.eq.s32.totalorder %s16, 0
    %p121 = por %p119, %p120
    %p122 = scmp.ne.s32.totalorder %s110, %s111
    %p123 = scmp.eq.s32.totalorder %s17, 1
    %p124 = por %p122, %p123
    %p126 = scmp.ne.s32.totalorder %s111, %s125
    %p127 = scmp.eq.s32.totalorder %s17, 0
    %p128 = por %p126, %p127
    %s129 = ssub.s32 %s11, %s18
    %p130 = scmp.eq.s32.totalorder %s129, 0
    %s132 = sadd.s32 %s131, 1
    %s133 = scalar_select %p130, %s131, %s132
    %p136 = pneg %p130
    %p137 = scmp.eq.s32.totalorder %s11, 1
    %p138 = por %p136, %p137
    %p139 = scmp.ne.s32.totalorder %s131, %s134
    %p140 = scmp.eq.s32.totalorder %s11, 0
    %p141 = por %p139, %p140
    %p142 = scmp.ne.s32.totalorder %s131, %s134
    %p143 = scmp.eq.s32.totalorder %s16, 1
    %p144 = por %p142, %p143
    %p145 = scmp.ne.s32.totalorder %s134, %s135
    %p146 = scmp.eq.s32.totalorder %s16, 0
    %p147 = por %p145, %p146
    %p148 = scmp.ne.s32.totalorder %s134, %s135
    %p149 = scmp.eq.s32.totalorder %s17, 1
    %p150 = por %p148, %p149
    %p152 = scmp.ne.s32.totalorder %s135, %s151
    %p153 = scmp.eq.s32.totalorder %s17, 0
    %p154 = por %p152, %p153
    %p155 = scmp.le.s32.totalorder 1, %s11
    %p156 = scmp.lt.s32.totalorder %s11, 3
    %p157 = pnand %p155, %p156
    %p158 = pneg %p157
    // Predicated region
    $region9: #{squeeze_and_excite.1} parent=5 // pred_check
      _
    $region10: #{squeeze_and_excite.1} parent=5 // pred_check_branch
      %160 = sbr.rel (%p157) target = $region12
    $region11: #{squeeze_and_excite.1} parent=5 // pred_region
      %s161 = ssub.s32 %s11, 1
      // Predicated region
      $region13: #{squeeze_and_excite.1} parent=11 // pred_check
        %p162 = pneg %p58
      $region14: #{squeeze_and_excite.1} parent=11 // pred_check_branch
        %164 = sbr.rel (%p162) target = $region16
      $region15: #{squeeze_and_excite.1} parent=11 // pred_region
        _
      $region16: #{squeeze_and_excite.1} parent=11 // pred_fallthru
        _
      // Predicated region
      $region17: #{squeeze_and_excite.1} parent=11 // pred_check
        %p165 = pneg %p79
      $region18: #{squeeze_and_excite.1} parent=11 // pred_check_branch
        %167 = sbr.rel (%p165) target = $region20
      $region19: #{squeeze_and_excite.1} parent=11 // pred_region
        _
      $region20: #{squeeze_and_excite.1} parent=11 // pred_fallthru
        _
      // Predicated region
      $region21: #{squeeze_and_excite.1} parent=11 // pred_check
        %p168 = pneg %p100
      $region22: #{squeeze_and_excite.1} parent=11 // pred_check_branch
        %170 = sbr.rel (%p168) target = $region24
      $region23: #{squeeze_and_excite.1} parent=11 // pred_region
        _
      $region24: #{squeeze_and_excite.1} parent=11 // pred_fallthru
        _
      // Predicated region
      $region25: #{squeeze_and_excite.1} parent=11 // pred_check
        %p171 = pneg %p121
      $region26: #{squeeze_and_excite.1} parent=11 // pred_check_branch
        %173 = sbr.rel (%p171) target = $region28
      $region27: #{squeeze_and_excite.1} parent=11 // pred_region
        _
      $region28: #{squeeze_and_excite.1} parent=11 // pred_fallthru
        _
    $region12: #{squeeze_and_excite.1} parent=5 // pred_fallthru
      _
    %p174 = scmp.lt.s32.totalorder %s11, 2
    // Predicated region
    $region29: #{squeeze_and_excite.1} parent=5 // pred_check
      %p175 = pneg %p174
    $region30: #{squeeze_and_excite.1} parent=5 // pred_check_branch
      %177 = sbr.rel (%p175) target = $region32
    $region31: #{squeeze_and_excite.1} parent=5 // pred_region
      // Predicated region
      $region33: #{squeeze_and_excite.1} parent=31 // pred_check
        %p178 = pneg %p31
      $region34: #{squeeze_and_excite.1} parent=31 // pred_check_branch
        %180 = sbr.rel (%p178) target = $region36
      $region35: #{squeeze_and_excite.1} parent=31 // pred_region
        %p181 = scmp.lt.s32.totalorder %s11, 1
        %s182 = scalar_select %p181, %s11, 1
        %s183 = smul.addr %s182, 8
        %s184 = smul.addr %s183, 8
        %s185 = scalar_lea.vmem %s0, %s184
      $region36: #{squeeze_and_excite.1} parent=31 // pred_fallthru
        _
    $region32: #{squeeze_and_excite.1} parent=5 // pred_fallthru
      _
    %p186 = scmp.le.s32.totalorder 1, %s11
    %p187 = scmp.lt.s32.totalorder %s11, 3
    %p188 = pnand %p186, %p187
    %p189 = pneg %p188
    // Predicated region
    $region37: #{squeeze_and_excite.1} parent=5 // pred_check
      _
    $region38: #{squeeze_and_excite.1} parent=5 // pred_check_branch
      %191 = sbr.rel (%p188) target = $region40
    $region39: #{squeeze_and_excite.1} parent=5 // pred_region
      %s192 = ssub.s32 %s11, 1
      %p193 = scmp.lt.s32.totalorder %s16, 1
      %s194 = scalar_select %p193, %s16, 1
      %s195 = smul.addr %s194, 8
      %s196 = smul.addr %s195, 8
      %s197 = scalar_lea.vmem %s0, %s196
      %p198 = pneg %p37
      %p199 = pneg %p34
      %p200 = pneg %p58
      %p201 = pneg %p55
      %p202 = pneg %p79
      %p203 = pneg %p76
      %p204 = pneg %p100
      %p205 = pneg %p97
      %p206 = pneg %p121
      %p207 = pneg %p118
      %p208 = pneg %p147
      %p209 = pneg %p144
      %p210 = scmp.lt.s32.totalorder %s16, 1
      %s211 = scalar_select %p210, %s16, 1
      %s212 = smul.addr %s211, 8
      %s213 = smul.addr %s212, 8
      %s214 = scalar_lea.vmem %s5, %s213
      %p215 = scmp.lt.s32.totalorder %s16, 1
      %s216 = scalar_select %p215, %s16, 1
      %s217 = smul.addr %s216, 8
      %s218 = smul.addr %s217, 8
      %s219 = scalar_lea.vmem %s0, %s218
      %p220 = scmp.lt.s32.totalorder %s16, 1
      %s221 = scalar_select %p220, %s16, 1
      %s222 = smul.addr %s221, 8
      %s223 = smul.addr %s222, 8
      %s224 = scalar_lea.vmem %s5, %s223
      %v225 = vld [vmem:[%s219] sm:$0xff]
      %v226 = vld [vmem:[%s219 + $0x8] sm:$0xff]
      %v227 = vld [vmem:[%s219 + $0x10] sm:$0xff]
      %v228 = vld [vmem:[%s219 + $0x18] sm:$0xff]
      %v229 = vld [vmem:[%s219 + $0x20] sm:$0xff]
      %v230 = vld [vmem:[%s219 + $0x28] sm:$0xff]
      %v231 = vld [vmem:[%s219 + $0x30] sm:$0xff]
      %v232 = vld [vmem:[%s219 + $0x38] sm:$0xff]
      %v233 = vadd.f32 %v225, %v226
      %234 = vadd.xlane.f32.xlu0 %v233
      %v235 = vpop.xlane.xlu0 %234
      %v236 = vadd.f32 %v227, %v228
      %237 = vadd.xlane.f32.xlu0 %v236
      %v238 = vpop.xlane.xlu0 %237
      %v239 = vadd.f32 %v229, %v230
      %240 = vadd.xlane.f32.xlu0 %v239
      %v241 = vpop.xlane.xlu0 %240
      %v242 = vadd.f32 %v231, %v232
      %243 = vadd.xlane.f32.xlu0 %v242
      %v244 = vpop.xlane.xlu0 %243
      %v245 = vmul.f32 %v235, 0.00390625
      %v246 = vmul.f32 %v238, 0.00390625
      %v247 = vmul.f32 %v241, 0.00390625
      %v248 = vmul.f32 %v244, 0.00390625
      %v249 = vld [vmem:[%s1] sm:$0xff]
      %v250 = vld [vmem:[%s1 + $0x8] sm:$0xff]
      %v251 = vld [vmem:[%s1 + $0x10] sm:$0xff]
      %v252 = vld [vmem:[%s1 + $0x18] sm:$0xff]
      %v253 = vld [vmem:[%s2] sm:$0x1]
      %v258 = vlaneseq
      %v259 = vand.u32 %v258, 127
      %v260 = vlaneseq
      %v261 = vshrl.u32 %v260, 7
      %v262 = vsub.s32 %v259, %v261
      %v263 = vrot.slane %v245, %v262
      %v264 = vadd.s32 %v259, 4294967288
      %v265 = vlaneseq
      %v266 = vshrl.u32 %v265, 7
      %v267 = vsub.s32 %v264, %v266
      %v268 = vrot.slane %v246, %v267
      %vm269 = vcmask 130112
      %v270 = vsel %vm269, %v268, %v263
      %v271 = vadd.s32 %v259, 4294967280
      %v272 = vlaneseq
      %v273 = vshrl.u32 %v272, 7
      %v274 = vsub.s32 %v271, %v273
      %v275 = vrot.slane %v247, %v274
      %vm276 = vcmask 195712
      %v277 = vsel %vm276, %v275, %v270
      %v278 = vadd.s32 %v259, 4294967272
      %v279 = vlaneseq
      %v280 = vshrl.u32 %v279, 7
      %v281 = vsub.s32 %v278, %v280
      %v282 = vrot.slane %v248, %v281
      %vm283 = vcmask 261312
      %v284 = vsel %vm283, %v282, %v277
      %vm285 = vcmask 261120
      %v286 = vsel %vm285, %v284, 0
      %288 = vmatprep.subr.mxu0 0.0
      %289 = vmatpush1.msra.mxu0 %v249
      %290 = vmatprep.subr.mxu0 0.0
      %291 = vmatpush1.msra.mxu0 %v250
      %292 = vmatprep.subr.mxu0 0.0
      %293 = vmatpush1.msra.mxu0 %v251
      %294 = vmatprep.subr.mxu0 0.0
      %295 = vmatpush1.msra.mxu0 %v252
      %296 = vmatprep.subr.mxu0 0.0
      %297 = vmatpush1.msra.mxu0 0.0
      %298 = vmatprep.subr.mxu0 0.0
      %299 = vmatpush1.msra.mxu0 0.0
      %300 = vmatprep.subr.mxu0 0.0
      %301 = vmatpush1.msra.mxu0 0.0
      %302 = vmatprep.subr.mxu0 0.0
      %303 = vmatpush1.msra.mxu0 0.0
      %304 = vmatprep.subr.mxu0 0.0
      %305 = vmatpush1.msra.mxu0 0.0
      %306 = vmatprep.subr.mxu0 0.0
      %307 = vmatpush1.msra.mxu0 0.0
      %308 = vmatprep.subr.mxu0 0.0
      %309 = vmatpush1.msra.mxu0 0.0
      %310 = vmatprep.subr.mxu0 0.0
      %311 = vmatpush1.msra.mxu0 0.0
      %312 = vmatprep.subr.mxu0 0.0
      %313 = vmatpush1.msra.mxu0 0.0
      %314 = vmatprep.subr.mxu0 0.0
      %315 = vmatpush1.msra.mxu0 0.0
      %316 = vmatprep.subr.mxu0 0.0
      %317 = vmatpush1.msra.mxu0 0.0
      %318 = vmatprep.subr.mxu0 0.0
      %319 = vmatpush1.msra.mxu0 0.0
      %320 = vmatprep.subr.mxu0 0.0
      %321 = vmatpush1.msra.mxu0 0.0
      %322 = vmatprep.subr.mxu0 0.0
      %323 = vmatpush1.msra.mxu0 0.0
      %324 = vmatprep.subr.mxu0 0.0
      %325 = vmatpush1.msra.mxu0 0.0
      %326 = vmatprep.subr.mxu0 0.0
      %327 = vmatpush1.msra.mxu0 0.0
      %328 = vmatprep.subr.mxu0 0.0
      %329 = vmatpush1.msra.mxu0 0.0
      %330 = vmatprep.subr.mxu0 0.0
      %331 = vmatpush1.msra.mxu0 0.0
      %332 = vmatprep.subr.mxu0 0.0
      %333 = vmatpush1.msra.mxu0 0.0
      %334 = vmatprep.subr.mxu0 0.0
      %335 = vmatpush1.msra.mxu0 0.0
      %336 = vmatprep.subr.mxu0 0.0
      %337 = vmatpush1.msra.mxu0 0.0
      %338 = vmatprep.subr.mxu0 0.0
      %339 = vmatpush1.msra.mxu0 0.0
      %340 = vmatprep.subr.mxu0 0.0
      %341 = vmatpush1.msra.mxu0 0.0
      %342 = vmatprep.subr.mxu0 0.0
      %343 = vmatpush1.msra.mxu0 0.0
      %344 = vmatprep.subr.mxu0 0.0
      %345 = vmatpush1.msra.mxu0 0.0
      %346 = vmatprep.subr.mxu0 0.0
      %347 = vmatpush1.msra.mxu0 0.0
      %348 = vmatprep.subr.mxu0 0.0
      %349 = vmatpush1.msra.mxu0 0.0
      %350 = vmatprep.subr.mxu0 0.0
      %351 = vmatpush1.msra.mxu0 0.0
      %352 = vmatprep.mubr.f32.mxu0 0.0
      %353 = vmatmul.mubr.f32.gmra.mrb[0].mxu0 %v286
      %v354 = vpop.f32.mrb[0].mxu0
      %v355 = vadd.f32 %v253, %v354
      %v356 = vpop.f32.mrb[0].mxu0
      %357 = vdwg.mxu0
      %v358 = vxor.u32 %v355, 2147483648
      %v359 = vmul.f32 %v358, 1.442695
      %v360 = vpow.pop %v359
      %v361 = vadd.f32 %v360, 1.0
      %v362 = vrcp.pop %v361
      %v363 = vmul.f32 1.0, %v362
      %v364 = vmul.f32 %v355, %v363
      %v365 = vld [vmem:[%s3] sm:$0xff]
      %v366 = vld [vmem:[%s4] sm:$0x1]
      %vm367 = vcmask 64512
      %v369 = vsel %vm367, %v364, 0
      %371 = vmatprep.subr.mxu0 0.0
      %372 = vmatpush1.msra.mxu0 %v365
      %373 = vmatprep.subr.mxu0 0.0
      %374 = vmatpush1.msra.mxu0 0.0
      %375 = vmatprep.subr.mxu0 0.0
      %376 = vmatpush1.msra.mxu0 0.0
      %377 = vmatprep.subr.mxu0 0.0
      %378 = vmatpush1.msra.mxu0 0.0
      %379 = vmatprep.subr.mxu0 0.0
      %380 = vmatpush1.msra.mxu0 0.0
      %381 = vmatprep.subr.mxu0 0.0
      %382 = vmatpush1.msra.mxu0 0.0
      %383 = vmatprep.subr.mxu0 0.0
      %384 = vmatpush1.msra.mxu0 0.0
      %385 = vmatprep.subr.mxu0 0.0
      %386 = vmatpush1.msra.mxu0 0.0
      %387 = vmatprep.subr.mxu0 0.0
      %388 = vmatpush1.msra.mxu0 0.0
      %389 = vmatprep.subr.mxu0 0.0
      %390 = vmatpush1.msra.mxu0 0.0
      %391 = vmatprep.subr.mxu0 0.0
      %392 = vmatpush1.msra.mxu0 0.0
      %393 = vmatprep.subr.mxu0 0.0
      %394 = vmatpush1.msra.mxu0 0.0
      %395 = vmatprep.subr.mxu0 0.0
      %396 = vmatpush1.msra.mxu0 0.0
      %397 = vmatprep.subr.mxu0 0.0
      %398 = vmatpush1.msra.mxu0 0.0
      %399 = vmatprep.subr.mxu0 0.0
      %400 = vmatpush1.msra.mxu0 0.0
      %401 = vmatprep.subr.mxu0 0.0
      %402 = vmatpush1.msra.mxu0 0.0
      %403 = vmatprep.subr.mxu0 0.0
      %404 = vmatpush1.msra.mxu0 0.0
      %405 = vmatprep.subr.mxu0 0.0
      %406 = vmatpush1.msra.mxu0 0.0
      %407 = vmatprep.subr.mxu0 0.0
      %408 = vmatpush1.msra.mxu0 0.0
      %409 = vmatprep.subr.mxu0 0.0
      %410 = vmatpush1.msra.mxu0 0.0
      %411 = vmatprep.subr.mxu0 0.0
      %412 = vmatpush1.msra.mxu0 0.0
      %413 = vmatprep.subr.mxu0 0.0
      %414 = vmatpush1.msra.mxu0 0.0
      %415 = vmatprep.subr.mxu0 0.0
      %416 = vmatpush1.msra.mxu0 0.0
      %417 = vmatprep.subr.mxu0 0.0
      %418 = vmatpush1.msra.mxu0 0.0
      %419 = vmatprep.subr.mxu0 0.0
      %420 = vmatpush1.msra.mxu0 0.0
      %421 = vmatprep.subr.mxu0 0.0
      %422 = vmatpush1.msra.mxu0 0.0
      %423 = vmatprep.subr.mxu0 0.0
      %424 = vmatpush1.msra.mxu0 0.0
      %425 = vmatprep.subr.mxu0 0.0
      %426 = vmatpush1.msra.mxu0 0.0
      %427 = vmatprep.subr.mxu0 0.0
      %428 = vmatpush1.msra.mxu0 0.0
      %429 = vmatprep.subr.mxu0 0.0
      %430 = vmatpush1.msra.mxu0 0.0
      %431 = vmatprep.subr.mxu0 0.0
      %432 = vmatpush1.msra.mxu0 0.0
      %433 = vmatprep.subr.mxu0 0.0
      %434 = vmatpush1.msra.mxu0 0.0
      %435 = vmatprep.mubr.f32.mxu0 0.0
      %436 = vmatmul.mubr.f32.gmra.mrb[0].mxu0 %v369
      %v437 = vpop.f32.mrb[0].mxu0
      %v438 = vadd.f32 %v366, %v437
      %v439 = vpop.f32.mrb[0].mxu0
      %440 = vdwg.mxu0
      %v441 = vxor.u32 %v438, 2147483648
      %v442 = vmul.f32 %v441, 1.442695
      %v443 = vpow.pop %v442
      %v444 = vadd.f32 %v443, 1.0
      %v445 = vrcp.pop %v444
      %v446 = vmul.f32 1.0, %v445
      %v447 = vlaneseq
      %v448 = vshrl.u32 %v447, 7
      %v449 = vsub.s32 0, %v448
      %v450 = vrot.slane %v446, %v449
      %452 = vbcast.lane.b32.xlu0 %v450, 256
      %v453 = vpop.permute.xlu0 %452
      %s455 = sor.u32 256, 8
      %456 = vbcast.lane.b32.xlu0 %v450, %s455
      %v457 = vpop.permute.xlu0 %456
      %s459 = sor.u32 256, 16
      %460 = vbcast.lane.b32.xlu0 %v450, %s459
      %v461 = vpop.permute.xlu0 %460
      %s463 = sor.u32 256, 24
      %464 = vbcast.lane.b32.xlu0 %v450, %s463
      %v465 = vpop.permute.xlu0 %464
      %v466 = vmul.f32 %v225, %v453
      %v467 = vmul.f32 %v226, %v453
      %v468 = vmul.f32 %v227, %v457
      %v469 = vmul.f32 %v228, %v457
      %v470 = vmul.f32 %v229, %v461
      %v471 = vmul.f32 %v230, %v461
      %v472 = vmul.f32 %v231, %v465
      %v473 = vmul.f32 %v232, %v465
      %474 = vst [vmem:[%s224] sm:$0xff] %v466
      %475 = vst [vmem:[%s224 + $0x8] sm:$0xff] %v467
      %476 = vst [vmem:[%s224 + $0x10] sm:$0xff] %v468
      %477 = vst [vmem:[%s224 + $0x18] sm:$0xff] %v469
      %478 = vst [vmem:[%s224 + $0x20] sm:$0xff] %v470
      %479 = vst [vmem:[%s224 + $0x28] sm:$0xff] %v471
      %480 = vst [vmem:[%s224 + $0x30] sm:$0xff] %v472
      %481 = vst [vmem:[%s224 + $0x38] sm:$0xff] %v473
      %p482 = scmp.lt.s32.totalorder %s16, 1
      %s483 = scalar_select %p482, %s16, 1
      %s484 = smul.addr %s483, 8
      %s485 = smul.addr %s484, 8
      %s486 = scalar_lea.vmem %s5, %s485
      // Predicated region
      $region41: #{squeeze_and_excite.1} parent=39 // pred_check
        %p487 = pneg %p144
      $region42: #{squeeze_and_excite.1} parent=39 // pred_check_branch
        %489 = sbr.rel (%p487) target = $region44
      $region43: #{squeeze_and_excite.1} parent=39 // pred_region
        _
      $region44: #{squeeze_and_excite.1} parent=39 // pred_fallthru
        _
    $region40: #{squeeze_and_excite.1} parent=5 // pred_fallthru
      _
    %p490 = scmp.le.s32.totalorder 2, %s11
    // Predicated region
    $region45: #{squeeze_and_excite.1} parent=5 // pred_check
      %p491 = pneg %p490
    $region46: #{squeeze_and_excite.1} parent=5 // pred_check_branch
      %493 = sbr.rel (%p491) target = $region48
    $region47: #{squeeze_and_excite.1} parent=5 // pred_region
      %s494 = ssub.s32 %s11, 2
      // Predicated region
      $region49: #{squeeze_and_excite.1} parent=47 // pred_check
        %p495 = pneg %p150
      $region50: #{squeeze_and_excite.1} parent=47 // pred_check_branch
        %497 = sbr.rel (%p495) target = $region52
      $region51: #{squeeze_and_excite.1} parent=47 // pred_region
        %p498 = scmp.lt.s32.totalorder %s17, 1
        %s499 = scalar_select %p498, %s17, 1
        %s500 = smul.addr %s499, 8
        %s501 = smul.addr %s500, 8
        %s502 = scalar_lea.vmem %s5, %s501
      $region52: #{squeeze_and_excite.1} parent=47 // pred_fallthru
        _
    $region48: #{squeeze_and_excite.1} parent=5 // pred_fallthru
      _
  $region6: #{squeeze_and_excite.1} parent=0 // loop_footer
    %s15 = sadd.s32 1, %s11
  $region7: #{squeeze_and_excite.1} parent=0 // loop_footer_branch
    %10 = sbr.rel target = $region3
  $region8: #{squeeze_and_excite.1} parent=0 // loop_exit
    _

</llo_original>
